<compile_context>
chip_gen: v6e
topology: v6e:2x2x1
jax: 0.10.0
libtpu: 0.0.40
codegen_flags: <defaults>
</compile_context>

<pallas_src>
import functools

import jax
import jax.numpy as jnp
from jax import lax
from jax.experimental import pallas as pl
from jax.experimental.pallas import tpu as pltpu


def _round_up(x, m):
    return ((x + m - 1) // m) * m


def _lane_pad(d):
    # Multiples of 256 feed v6e/v7x's 2x256x256 MXUs with full passes; tiny
    # dims only need the 128-lane minimum (v5e's 4x128x128 is fine either way).
    return _round_up(d, 128) if d <= 128 else _round_up(d, 256)


def _layer_norm(z, gamma, beta, d_model, eps):
    """LayerNorm over the (possibly lane-padded) last dim, stats masked to d_model."""
    d_pad = z.shape[-1]
    if d_pad == d_model:
        mean = jnp.mean(z, axis=-1, keepdims=True)
        diff = z - mean
        var = jnp.mean(diff * diff, axis=-1, keepdims=True)
    else:
        lane = lax.broadcasted_iota(jnp.int32, z.shape, 1)
        mask = lane < d_model
        inv_d = 1.0 / d_model
        zm = jnp.where(mask, z, 0.0)
        mean = jnp.sum(zm, axis=-1, keepdims=True) * inv_d
        diff = jnp.where(mask, z - mean, 0.0)
        var = jnp.sum(diff * diff, axis=-1, keepdims=True) * inv_d
    zn = (z - mean) * lax.rsqrt(var + eps)
    return zn * gamma + beta


# ----------------------------------------------------------------------------
# Kernels
# ----------------------------------------------------------------------------
def _ffn_resident_kernel(x_ref, w1_ref, b1_ref, w2_ref, b2_ref, gamma_ref,
                         beta_ref, o_ref, *, d_model, eps):
    """Weight-resident path: whole W1/W2 live in VMEM, single grid axis over rows."""
    x = x_ref[...]
    h = jnp.dot(x, w1_ref[...], preferred_element_type=jnp.float32)
    h = jnp.maximum(h + b1_ref[...].astype(jnp.float32), 0.0)         # ReLU (f32)
    y = jnp.dot(h.astype(w2_ref.dtype), w2_ref[...],
                preferred_element_type=jnp.float32)
    # dropout == identity (inference); residual add in f32.
    z = y + b2_ref[...].astype(jnp.float32) + x.astype(jnp.float32)
    out = _layer_norm(z, gamma_ref[...].astype(jnp.float32),
                      beta_ref[...].astype(jnp.float32), d_model, eps)
    o_ref[...] = out.astype(o_ref.dtype)


def _ffn_streamed_kernel(x_ref, w1_ref, b1_ref, w2_ref, b2_ref, gamma_ref,
                         beta_ref, o_ref, acc_ref, *, d_model, eps):
    """Streamed path: d_ff tiled on the (arbitrary) k axis, f32 accumulator."""
    k = pl.program_id(1)
    x = x_ref[...]
    h = jnp.dot(x, w1_ref[...], preferred_element_type=jnp.float32)
    h = jnp.maximum(h + b1_ref[...].astype(jnp.float32), 0.0)
    part = jnp.dot(h.astype(w2_ref.dtype), w2_ref[...],
                   preferred_element_type=jnp.float32)

    # Skip the zero-fill + first RMW: write directly on the first k step.
    @pl.when(k == 0)
    def _first():
        acc_ref[...] = part

    @pl.when(k > 0)
    def _rest():
        acc_ref[...] += part

    @pl.when(k == pl.num_programs(1) - 1)
    def _finalize():
        z = acc_ref[...] + b2_ref[...].astype(jnp.float32) + x.astype(jnp.float32)
        out = _layer_norm(z, gamma_ref[...].astype(jnp.float32),
                          beta_ref[...].astype(jnp.float32), d_model, eps)
        o_ref[...] = out.astype(o_ref.dtype)


# ----------------------------------------------------------------------------
# Chip-aware configuration
# ----------------------------------------------------------------------------
def _chip_info():
    vmem_cap = 128 * 1024 * 1024
    kind = ""
    try:
        info = pltpu.get_tpu_info()
        vmem_cap = int(getattr(info, "vmem_capacity_bytes", vmem_cap))
    except Exception:
        pass
    try:
        kind = jax.devices()[0].device_kind.lower()
    except Exception:
        pass
    return vmem_cap, kind


def _choose_config(n, d_pad, f_pad, x_bytes, w_bytes, o_bytes):
    vmem_cap, kind = _chip_info()
    vmem_limit = int(vmem_cap * 3 // 4)
    usable = int(vmem_limit * 0.85)          # headroom for compiler-internal scratch

    # Streamed-mode row-tile targets (compute-bound thresholds ~240 v5e,
    # ~675 v6e, ~310 per-TC v7x) and d_ff chunk preference.
    if "v7" in kind or "7x" in kind:
        tm_pref, tf_pref = 384, 512
    elif "v6" in kind:
        tm_pref, tf_pref = 768, 1024
    elif "v5" in kind:
        tm_pref, tf_pref = 512, 1024
    else:
        tm_pref, tf_pref = 512, 512

    # Row-tile upper bound: no bigger than the row count, and keep >=2 row
    # tiles when possible so both v7x TensorCores get work.
    n8 = _round_up(max(n, 1), 8)
    max_tm = n8
    if n8 >= 16:
        max_tm = min(max_tm, max(8, (n8 // 2) // 8 * 8))

    small = 4 * (f_pad + 3 * d_pad) * 4      # biases / gamma / beta buffers

    def resident_fits(tm):
        weights = 2 * 2 * d_pad * f_pad * w_bytes       # W1 + W2, 2 buffers each
        xio = 2 * tm * d_pad * (x_bytes + o_bytes)      # x + out, double-buffered
        temps = tm * f_pad * 4 + tm * d_pad * 4         # f32 h + LayerNorm temps
        return weights + xio + temps + small <= usable

    def streamed_fits(tm, tf):
        wchunks = 2 * 2 * d_pad * tf * w_bytes          # W1 + W2 chunks, 2 buffers
        xio = 2 * tm * d_pad * (x_bytes + o_bytes)
        acc = tm * d_pad * 4
        temps = tm * tf * 4 + tm * d_pad * 4
        return wchunks + xio + acc + temps + small <= usable

    # --- weight-resident fast path -------------------------------------------------
    res_tms = sorted({t for t in (512, 384, 256, 128, 64, 32, 16, 8) if t <= max_tm},
                     reverse=True) or [max_tm]
    for tm in res_tms:
        if resident_fits(tm):
            return dict(mode="resident", tm=tm, tf=f_pad, vmem_limit=vmem_limit)

    # --- streamed fallback: prioritise tm (weight re-streaming intensity),
    #     then the largest tf that fits (fewer accumulator RMW passes) --------------
    tm_s = sorted({t for t in (tm_pref, 768, 512, 384, 256, 128, 64, 32, 16, 8)
                   if t <= max_tm}, reverse=True) or [max_tm]
    tf_s = sorted({tf for tf in (tf_pref, 2048, 1024, 512, 256, 128)
                   if tf <= f_pad and f_pad % tf == 0}, reverse=True) or [f_pad]
    for tm in tm_s:
        for tf in tf_s:
            if streamed_fits(tm, tf):
                return dict(mode="streamed", tm=tm, tf=tf, vmem_limit=vmem_limit)
    return dict(mode="streamed", tm=tm_s[-1], tf=tf_s[-1], vmem_limit=vmem_limit)


# ----------------------------------------------------------------------------
# Public wrappers
# ----------------------------------------------------------------------------
def prepare_ffn_params(w1, b1, w2, b2, gamma, beta, *, compute_dtype=None):
    """Pad (and optionally cast) FFN parameters ONCE, outside the per-call path."""
    d_model, d_ff = w1.shape
    d_pad = _lane_pad(d_model)
    f_pad = _lane_pad(d_ff)
    if compute_dtype is not None:
        # bf16 fast path: ~2x MXU throughput, half the VMEM/HBM footprint.
        w1 = w1.astype(compute_dtype)
        w2 = w2.astype(compute_dtype)
    return dict(
        w1=jnp.pad(w1, ((0, d_pad - d_model), (0, f_pad - d_ff))),
        b1=jnp.pad(b1, (0, f_pad - d_ff)).reshape(1, f_pad),
        w2=jnp.pad(w2, ((0, f_pad - d_ff), (0, d_pad - d_model))),
        b2=jnp.pad(b2, (0, d_pad - d_model)).reshape(1, d_pad),
        gamma=jnp.pad(gamma, (0, d_pad - d_model)).reshape(1, d_pad),
        beta=jnp.pad(beta, (0, d_pad - d_model)).reshape(1, d_pad),
        d_model=int(d_model), d_ff=int(d_ff), d_pad=int(d_pad), f_pad=int(f_pad),
    )


def feed_forward_net(x, params, *, eps=1e-5):
    """x: [batch, seq, d_model] -> [batch, seq, d_model] (in x.dtype)."""
    batch, seq, d_model = x.shape
    assert d_model == params["d_model"]
    d_pad, f_pad = params["d_pad"], params["f_pad"]
    n = batch * seq
    out_dtype = x.dtype

    cfg = _choose_config(n, d_pad, f_pad,
                         x.dtype.itemsize, params["w1"].dtype.itemsize,
                         jnp.dtype(out_dtype).itemsize)
    mode, tm, tf, vmem_limit = cfg["mode"], cfg["tm"], cfg["tf"], cfg["vmem_limit"]
    n_pad = _round_up(n, tm)

    x2d = x.reshape(n, d_model)
    if n_pad != n or d_pad != d_model:
        x2d = jnp.pad(x2d, ((0, n_pad - n), (0, d_pad - d_model)))

    w_bytes = (params["w1"].size * params["w1"].dtype.itemsize
               + params["w2"].size * params["w2"].dtype.itemsize)
    io_bytes = (x2d.size * x2d.dtype.itemsize
                + n_pad * d_pad * jnp.dtype(out_dtype).itemsize)

    if mode == "resident":
        grid = (n_pad // tm,)
        kernel = functools.partial(_ffn_resident_kernel, d_model=d_model, eps=eps)
        in_specs = [
            pl.BlockSpec((tm, d_pad), lambda i: (i, 0)),      # x rows
            pl.BlockSpec((d_pad, f_pad), lambda i: (0, 0)),   # W1 (resident)
            pl.BlockSpec((1, f_pad), lambda i: (0, 0)),       # b1
            pl.BlockSpec((f_pad, d_pad), lambda i: (0, 0)),   # W2 (resident)
            pl.BlockSpec((1, d_pad), lambda i: (0, 0)),       # b2
            pl.BlockSpec((1, d_pad), lambda i: (0, 0)),       # gamma
            pl.BlockSpec((1, d_pad), lambda i: (0, 0)),       # beta
        ]
        out_specs = pl.BlockSpec((tm, d_pad), lambda i: (i, 0))
        scratch_shapes = []
        dim_sem = ("parallel",)
        bytes_accessed = io_bytes + w_bytes                   # weights DMA'd once
    else:
        grid = (n_pad // tm, f_pad // tf)
        kernel = functools.partial(_ffn_streamed_kernel, d_model=d_model, eps=eps)
        in_specs = [
            pl.BlockSpec((tm, d_pad), lambda i, k: (i, 0)),   # x rows
            pl.BlockSpec((d_pad, tf), lambda i, k: (0, k)),   # W1 chunk
            pl.BlockSpec((1, tf), lambda i, k: (0, k)),       # b1 chunk
            pl.BlockSpec((tf, d_pad), lambda i, k: (k, 0)),   # W2 chunk
            pl.BlockSpec((1, d_pad), lambda i, k: (0, 0)),    # b2
            pl.BlockSpec((1, d_pad), lambda i, k: (0, 0)),    # gamma
            pl.BlockSpec((1, d_pad), lambda i, k: (0, 0)),    # beta
        ]
        out_specs = pl.BlockSpec((tm, d_pad), lambda i, k: (i, 0))
        scratch_shapes = [pltpu.VMEM((tm, d_pad), jnp.float32)]
        dim_sem = ("parallel", "arbitrary")
        bytes_accessed = io_bytes + w_bytes * grid[0]         # weights re-streamed

    flops = 4 * n_pad * d_pad * f_pad                         # two matmuls, 2 flops/MAC

    out2d = pl.pallas_call(
        kernel,
        out_shape=jax.ShapeDtypeStruct((n_pad, d_pad), out_dtype),
        grid_spec=pltpu.PrefetchScalarGridSpec(
            num_scalar_prefetch=0,
            grid=grid,
            in_specs=in_specs,
            out_specs=out_specs,
            scratch_shapes=scratch_shapes,
        ),
        compiler_params=pltpu.CompilerParams(
            dimension_semantics=dim_sem,
            vmem_limit_bytes=vmem_limit,
        ),
        cost_estimate=pl.CostEstimate(flops=int(flops), transcendentals=int(n_pad),
                                      bytes_accessed=int(bytes_accessed)),
    )(x2d, params["w1"], params["b1"], params["w2"], params["b2"],
      params["gamma"], params["beta"])

    if n_pad != n or d_pad != d_model:
        out2d = out2d[:n, :d_model]
    return out2d.reshape(batch, seq, d_model)


# ----------------------------------------------------------------------------
# Reference + self-test
# ----------------------------------------------------------------------------
def _reference(x, w1, b1, w2, b2, gamma, beta, eps=1e-5):
    h = jnp.maximum(x @ w1 + b1, 0.0)
    y = h @ w2 + b2
    z = y + x
    mean = jnp.mean(z, axis=-1, keepdims=True)
    var = jnp.mean((z - mean) ** 2, axis=-1, keepdims=True)
    return (z - mean) / jnp.sqrt(var + eps) * gamma + beta


if __name__ == "__main__":
    batch, seq = 2, 8
    d_model, d_ff = 32, 64

    key = jax.random.PRNGKey(0)
    kx, kw1, kb1, kw2, kb2 = jax.random.split(key, 5)

    x = jax.random.normal(kx, (batch, seq, d_model), dtype=jnp.float32)

    # Deterministic parameter init (torch.nn.Linear-style uniform bounds).
    lim1 = 1.0 / (d_model ** 0.5)
    lim2 = 1.0 / (d_ff ** 0.5)
    w1 = jax.random.uniform(kw1, (d_model, d_ff), minval=-lim1, maxval=lim1, dtype=jnp.float32)
    b1 = jax.random.uniform(kb1, (d_ff,), minval=-lim1, maxval=lim1, dtype=jnp.float32)
    w2 = jax.random.uniform(kw2, (d_ff, d_model), minval=-lim2, maxval=lim2, dtype=jnp.float32)
    b2 = jax.random.uniform(kb2, (d_model,), minval=-lim2, maxval=lim2, dtype=jnp.float32)
    gamma = jnp.ones((d_model,), dtype=jnp.float32)   # nn.LayerNorm default weight
    beta = jnp.zeros((d_model,), dtype=jnp.float32)   # nn.LayerNorm default bias

    params = prepare_ffn_params(w1, b1, w2, b2, gamma, beta)   # padded once (hoisted)
    out = feed_forward_net(x, params)
    out = jax.block_until_ready(out)

    ref = _reference(x, w1, b1, w2, b2, gamma, beta)
    assert out.shape == (batch, seq, d_model)
    # MXU default-precision f32 matmuls (bf16 passes) may differ at ~1e-3 level
    # from the XLA reference; tolerance set accordingly.
    assert jnp.allclose(out, ref, atol=1e-2, rtol=1e-2), "mismatch vs reference"

    print("KERNEL_OK")
</pallas_src>

<mosaic_0001>
module attributes {stable_mosaic.version = 11 : i64} {
  func.func @_ffn_resident_kernel(%arg0: i32, %arg1: memref<8x128xf32, #tpu.memory_space<vmem>>, %arg2: memref<128x128xf32, #tpu.memory_space<vmem>>, %arg3: memref<1x128xf32, #tpu.memory_space<vmem>>, %arg4: memref<128x128xf32, #tpu.memory_space<vmem>>, %arg5: memref<1x128xf32, #tpu.memory_space<vmem>>, %arg6: memref<1x128xf32, #tpu.memory_space<vmem>>, %arg7: memref<1x128xf32, #tpu.memory_space<vmem>>, %arg8: memref<8x128xf32, #tpu.memory_space<vmem>>) attributes {dimension_semantics = [#tpu.dimension_semantics<parallel>], iteration_bounds = array<i64: 2>, scalar_prefetch = 0 : i64, scratch_operands = 0 : i64, tpu.core_type = #tpu.core_type<tc>, window_params = [{transform_indices = @transform_0, window_bounds = array<i64: 8, 128>}, {pipeline_mode = #tpu.pipeline_mode<synchronous>, transform_indices = @transform_1, window_bounds = array<i64: 128, 128>}, {pipeline_mode = #tpu.pipeline_mode<synchronous>, transform_indices = @transform_2, window_bounds = array<i64: 1, 128>}, {pipeline_mode = #tpu.pipeline_mode<synchronous>, transform_indices = @transform_3, window_bounds = array<i64: 128, 128>}, {pipeline_mode = #tpu.pipeline_mode<synchronous>, transform_indices = @transform_4, window_bounds = array<i64: 1, 128>}, {pipeline_mode = #tpu.pipeline_mode<synchronous>, transform_indices = @transform_5, window_bounds = array<i64: 1, 128>}, {pipeline_mode = #tpu.pipeline_mode<synchronous>, transform_indices = @transform_6, window_bounds = array<i64: 1, 128>}, {transform_indices = @transform_7, window_bounds = array<i64: 8, 128>}]} {
    %c0 = arith.constant 0 : index
    %c0_0 = arith.constant 0 : index
    %0 = vector.load %arg1[%c0, %c0_0] : memref<8x128xf32, #tpu.memory_space<vmem>>, vector<8x128xf32>
    %c0_1 = arith.constant 0 : index
    %c0_2 = arith.constant 0 : index
    %1 = vector.load %arg2[%c0_1, %c0_2] : memref<128x128xf32, #tpu.memory_space<vmem>>, vector<128x128xf32>
    %cst = arith.constant dense<0.000000e+00> : vector<8x128xf32>
    %2 = tpu.matmul %0, %1, %cst {dimension_numbers = #tpu.dot_dimension_numbers<[1], [0], [0], [1], [0, 0, 1, 1], [], []>} : vector<8x128xf32>, vector<128x128xf32>, vector<8x128xf32> -> vector<8x128xf32>
    %c0_3 = arith.constant 0 : index
    %c0_4 = arith.constant 0 : index
    %3 = vector.load %arg3[%c0_3, %c0_4] : memref<1x128xf32, #tpu.memory_space<vmem>>, vector<1x128xf32>
    %4 = vector.broadcast %3 : vector<1x128xf32> to vector<8x128xf32>
    %5 = arith.addf %2, %4 : vector<8x128xf32>
    %cst_5 = arith.constant 0.000000e+00 : f32
    %6 = vector.broadcast %cst_5 : f32 to vector<8x128xf32>
    %7 = arith.maximumf %5, %6 : vector<8x128xf32>
    %c0_6 = arith.constant 0 : index
    %c0_7 = arith.constant 0 : index
    %8 = vector.load %arg4[%c0_6, %c0_7] : memref<128x128xf32, #tpu.memory_space<vmem>>, vector<128x128xf32>
    %cst_8 = arith.constant dense<0.000000e+00> : vector<8x128xf32>
    %9 = tpu.matmul %7, %8, %cst_8 {dimension_numbers = #tpu.dot_dimension_numbers<[1], [0], [0], [1], [0, 0, 1, 1], [], []>} : vector<8x128xf32>, vector<128x128xf32>, vector<8x128xf32> -> vector<8x128xf32>
    %c0_9 = arith.constant 0 : index
    %c0_10 = arith.constant 0 : index
    %10 = vector.load %arg5[%c0_9, %c0_10] : memref<1x128xf32, #tpu.memory_space<vmem>>, vector<1x128xf32>
    %11 = vector.broadcast %10 : vector<1x128xf32> to vector<8x128xf32>
    %12 = arith.addf %9, %11 : vector<8x128xf32>
    %13 = arith.addf %12, %0 : vector<8x128xf32>
    %c0_11 = arith.constant 0 : index
    %c0_12 = arith.constant 0 : index
    %14 = vector.load %arg6[%c0_11, %c0_12] : memref<1x128xf32, #tpu.memory_space<vmem>>, vector<1x128xf32>
    %c0_13 = arith.constant 0 : index
    %c0_14 = arith.constant 0 : index
    %15 = vector.load %arg7[%c0_13, %c0_14] : memref<1x128xf32, #tpu.memory_space<vmem>>, vector<1x128xf32>
    %16 = tpu.iota {dimensions = array<i32: 1>} : vector<8x128xi32>
    %c32_i32 = arith.constant 32 : i32
    %17 = vector.broadcast %c32_i32 : i32 to vector<8x128xi32>
    %18 = arith.cmpi slt, %16, %17 : vector<8x128xi32>
    %cst_15 = arith.constant 0.000000e+00 : f32
    %19 = vector.broadcast %cst_15 : f32 to vector<8x128xf32>
    %20 = arith.select %18, %13, %19 : vector<8x128xi1>, vector<8x128xf32>
    %cst_16 = arith.constant dense<0.000000e+00> : vector<8xf32>
    %21 = vector.multi_reduction <add>, %20, %cst_16 [1] : vector<8x128xf32> to vector<8xf32>
    %22 = vector.shape_cast %21 : vector<8xf32> to vector<8x1xf32>
    %cst_17 = arith.constant 3.125000e-02 : f32
    %23 = vector.broadcast %cst_17 : f32 to vector<8x1xf32>
    %24 = arith.mulf %22, %23 : vector<8x1xf32>
    %25 = vector.broadcast %24 : vector<8x1xf32> to vector<8x128xf32>
    %26 = arith.subf %13, %25 : vector<8x128xf32>
    %cst_18 = arith.constant 0.000000e+00 : f32
    %27 = vector.broadcast %cst_18 : f32 to vector<8x128xf32>
    %28 = arith.select %18, %26, %27 : vector<8x128xi1>, vector<8x128xf32>
    %29 = arith.mulf %28, %28 : vector<8x128xf32>
    %cst_19 = arith.constant dense<0.000000e+00> : vector<8xf32>
    %30 = vector.multi_reduction <add>, %29, %cst_19 [1] : vector<8x128xf32> to vector<8xf32>
    %31 = vector.shape_cast %30 : vector<8xf32> to vector<8x1xf32>
    %cst_20 = arith.constant 3.125000e-02 : f32
    %32 = vector.broadcast %cst_20 : f32 to vector<8x1xf32>
    %33 = arith.mulf %31, %32 : vector<8x1xf32>
    %34 = vector.broadcast %24 : vector<8x1xf32> to vector<8x128xf32>
    %35 = arith.subf %13, %34 : vector<8x128xf32>
    %cst_21 = arith.constant 9.99999974E-6 : f32
    %36 = vector.broadcast %cst_21 : f32 to vector<8x1xf32>
    %37 = arith.addf %33, %36 : vector<8x1xf32>
    %38 = math.rsqrt %37 : vector<8x1xf32>
    %39 = vector.broadcast %38 : vector<8x1xf32> to vector<8x128xf32>
    %40 = arith.mulf %35, %39 : vector<8x128xf32>
    %41 = vector.broadcast %14 : vector<1x128xf32> to vector<8x128xf32>
    %42 = arith.mulf %40, %41 : vector<8x128xf32>
    %43 = vector.broadcast %15 : vector<1x128xf32> to vector<8x128xf32>
    %44 = arith.addf %42, %43 : vector<8x128xf32>
    %c0_22 = arith.constant 0 : index
    %c0_23 = arith.constant 0 : index
    %45 = vector.load %arg8[%c0_22, %c0_23] : memref<8x128xf32, #tpu.memory_space<vmem>>, vector<8x128xf32>
    tpu.vector_store %arg8[%c0_22, %c0_23], %44 {strides = array<i32>} : memref<8x128xf32, #tpu.memory_space<vmem>>, vector<8x128xf32>,
    return
  }
  func.func @transform_0(%arg0: i32) -> (i32, i32) {
    %c0_i32 = arith.constant 0 : i32
    %c0_i32_0 = arith.constant 0 : i32
    return %arg0, %c0_i32 : i32, i32
  }
  func.func @transform_1(%arg0: i32) -> (i32, i32) {
    %c0_i32 = arith.constant 0 : i32
    %c0_i32_0 = arith.constant 0 : i32
    %c0_i32_1 = arith.constant 0 : i32
    return %c0_i32, %c0_i32_0 : i32, i32
  }
  func.func @transform_2(%arg0: i32) -> (i32, i32) {
    %c0_i32 = arith.constant 0 : i32
    %c0_i32_0 = arith.constant 0 : i32
    %c0_i32_1 = arith.constant 0 : i32
    return %c0_i32, %c0_i32_0 : i32, i32
  }
  func.func @transform_3(%arg0: i32) -> (i32, i32) {
    %c0_i32 = arith.constant 0 : i32
    %c0_i32_0 = arith.constant 0 : i32
    %c0_i32_1 = arith.constant 0 : i32
    return %c0_i32, %c0_i32_0 : i32, i32
  }
  func.func @transform_4(%arg0: i32) -> (i32, i32) {
    %c0_i32 = arith.constant 0 : i32
    %c0_i32_0 = arith.constant 0 : i32
    %c0_i32_1 = arith.constant 0 : i32
    return %c0_i32, %c0_i32_0 : i32, i32
  }
  func.func @transform_5(%arg0: i32) -> (i32, i32) {
    %c0_i32 = arith.constant 0 : i32
    %c0_i32_0 = arith.constant 0 : i32
    %c0_i32_1 = arith.constant 0 : i32
    return %c0_i32, %c0_i32_0 : i32, i32
  }
  func.func @transform_6(%arg0: i32) -> (i32, i32) {
    %c0_i32 = arith.constant 0 : i32
    %c0_i32_0 = arith.constant 0 : i32
    %c0_i32_1 = arith.constant 0 : i32
    return %c0_i32, %c0_i32_0 : i32, i32
  }
  func.func @transform_7(%arg0: i32) -> (i32, i32) {
    %c0_i32 = arith.constant 0 : i32
    %c0_i32_0 = arith.constant 0 : i32
    return %arg0, %c0_i32 : i32, i32
  }
}

</mosaic_0001>

<llo_original>
// kernel: tpu_custom_call.1
$region0: #{tpu_custom_call.1}
  #allocation0 [shape = 'u32[]', space=smem, size = 0x4, offset = 0x4, fixed_abs, tag = 'smem constant byte address 0x4 - core index']
  #allocation1 [shape = 'u32[144,128]{1,0:T(1,128)}', space=vmem, size = 0x12000, scoped, tag = 'internal scratch']
  %s0 = inlined_call_operand.hbm [shape: f32[16,128], index: 0, kind: input, shape index: {}]
  %s1 = inlined_call_operand.hbm [shape: f32[128,128], index: 1, kind: input, shape index: {}]
  %s2 = inlined_call_operand.vmem [shape: f32[1,128], index: 2, kind: input, shape index: {}]
  %s3 = inlined_call_operand.hbm [shape: f32[128,128], index: 3, kind: input, shape index: {}]
  %s4 = inlined_call_operand.vmem [shape: f32[1,128], index: 4, kind: input, shape index: {}]
  %s5 = inlined_call_operand.vmem [shape: f32[1,128], index: 5, kind: input, shape index: {}]
  %s6 = inlined_call_operand.vmem [shape: f32[1,128], index: 6, kind: input, shape index: {}]
  %s7 = inlined_call_operand.hbm [shape: f32[16,128], index: 7, kind: output, shape index: {}]
  %s8 = sld [smem:[#allocation0]]
  $region73: #{tpu_custom_call.1} parent=0
    _
  %s10 = ssub.s32 1, %s8
  %s11 = scalar_select 0, %s10, %s8
  $region1: #{tpu_custom_call.1} parent=0
    #allocation2 [shape = 'u8[8192]{0}', space=vmem, size = 0x2000, scoped, tag = 'input window, operand 0']
    #allocation3 [shape = 's32[2]{0}', space=sflag, size = 0x8, scoped, tag = 'scoped memory for tpu_custom_call.1']
    #allocation4 [shape = 's32[2]{0}', space=sflag, size = 0x8, scoped, tag = 'scoped memory for tpu_custom_call.1']
    #allocation5 [shape = 'u8[65536]{0}', space=vmem, size = 0x10000, scoped, tag = 'input window, operand 1, single buffered']
    #allocation6 [shape = 's32[1]{0}', space=sflag, size = 0x4, scoped, tag = 'scoped memory for tpu_custom_call.1']
    #allocation7 [shape = 'u8[65536]{0}', space=vmem, size = 0x10000, scoped, tag = 'input window, operand 3, single buffered']
    #allocation8 [shape = 'u8[8192]{0}', space=vmem, size = 0x2000, scoped, tag = 'output window, operand 0']
    %12 = vsyncpa [#allocation3], 0
    %s13 = scalar_lea.sflag [#allocation3], 1
    %14 = vsyncpa %s13, 0
    %15 = vsyncpa [#allocation6], 0
    %16 = vsyncpa [#allocation4], 0
    %s17 = scalar_lea.sflag [#allocation4], 1
    %18 = vsyncpa %s17, 0
    loop: start=0, step=1, limit=4
    $region2: #{tpu_custom_call.1} parent=1 // loop_pre_header
      _
    $region3: #{tpu_custom_call.1} parent=1 // loop_header
      %s20 = sphi 0, %s24
      %p21 = scmp.ge.s32.totalorder %s20, 4
      %s30 = sphi 0, %s32
      %s33 = sphi 0, %s30
      %s34 = sphi 0, %s33
      %s50 = sphi 0, %s34
      %s54 = sphi 0, %s54
      %s56 = sphi 0, %s54
      %s57 = sphi 0, %s56
      %s71 = sphi 0, %s57
      %s75 = sphi 0, %s75
      %s77 = sphi 0, %s75
      %s78 = sphi 0, %s77
      %s92 = sphi 0, %s78
      %s96 = sphi 0, %s96
      %s98 = sphi 0, %s96
      %s99 = sphi 0, %s98
      %s113 = sphi 0, %s99
      %s117 = sphi 0, %s117
      %s119 = sphi 0, %s117
      %s120 = sphi 0, %s119
      %s134 = sphi 0, %s120
      %s138 = sphi 0, %s138
      %s140 = sphi 0, %s138
      %s141 = sphi 0, %s140
      %s155 = sphi 0, %s141
      %s159 = sphi 0, %s159
      %s161 = sphi 0, %s159
      %s162 = sphi 0, %s161
      %s176 = sphi 0, %s162
      %s182 = sphi 0, %s184
      %s185 = sphi 0, %s182
      %s186 = sphi 0, %s185
      %s202 = sphi 0, %s186
    $region4: #{tpu_custom_call.1} parent=1 // loop_header_branch
      %23 = sbr.rel (%p21) target = $region8
    $region5: #{tpu_custom_call.1} parent=1 // loop_body
      %s25 = ssub.s32 %s20, 1
      %s26 = ssub.s32 %s20, 2
      %s27 = sadd.s32 %s20, 1
      %s28 = ssub.s32 %s20, %s27
      %p29 = scmp.eq.s32.totalorder %s28, 0
      %s31 = sadd.s32 %s30, 1
      %s32 = scalar_select %p29, %s30, %s31
      %p35 = pneg %p29
      %p36 = scmp.eq.s32.totalorder %s20, 1
      %p37 = por %p35, %p36
      %p38 = scmp.ne.s32.totalorder %s30, %s33
      %p39 = scmp.eq.s32.totalorder %s20, 0
      %p40 = por %p38, %p39
      %p41 = scmp.ne.s32.totalorder %s30, %s33
      %p42 = scmp.eq.s32.totalorder %s25, 1
      %p43 = por %p41, %p42
      %p44 = scmp.ne.s32.totalorder %s33, %s34
      %p45 = scmp.eq.s32.totalorder %s25, 0
      %p46 = por %p44, %p45
      %p47 = scmp.ne.s32.totalorder %s33, %s34
      %p48 = scmp.eq.s32.totalorder %s26, 1
      %p49 = por %p47, %p48
      %p51 = scmp.ne.s32.totalorder %s34, %s50
      %p52 = scmp.eq.s32.totalorder %s26, 0
      %p53 = por %p51, %p52
      %s55 = sadd.s32 %s54, 1
      %p58 = scmp.eq.s32.totalorder %s20, 1
      %p59 = scmp.ne.s32.totalorder %s54, %s56
      %p60 = scmp.eq.s32.totalorder %s20, 0
      %p61 = por %p59, %p60
      %p62 = scmp.ne.s32.totalorder %s54, %s56
      %p63 = scmp.eq.s32.totalorder %s25, 1
      %p64 = por %p62, %p63
      %p65 = scmp.ne.s32.totalorder %s56, %s57
      %p66 = scmp.eq.s32.totalorder %s25, 0
      %p67 = por %p65, %p66
      %p68 = scmp.ne.s32.totalorder %s56, %s57
      %p69 = scmp.eq.s32.totalorder %s26, 1
      %p70 = por %p68, %p69
      %p72 = scmp.ne.s32.totalorder %s57, %s71
      %p73 = scmp.eq.s32.totalorder %s26, 0
      %p74 = por %p72, %p73
      %s76 = sadd.s32 %s75, 1
      %p79 = scmp.eq.s32.totalorder %s20, 1
      %p80 = scmp.ne.s32.totalorder %s75, %s77
      %p81 = scmp.eq.s32.totalorder %s20, 0
      %p82 = por %p80, %p81
      %p83 = scmp.ne.s32.totalorder %s75, %s77
      %p84 = scmp.eq.s32.totalorder %s25, 1
      %p85 = por %p83, %p84
      %p86 = scmp.ne.s32.totalorder %s77, %s78
      %p87 = scmp.eq.s32.totalorder %s25, 0
      %p88 = por %p86, %p87
      %p89 = scmp.ne.s32.totalorder %s77, %s78
      %p90 = scmp.eq.s32.totalorder %s26, 1
      %p91 = por %p89, %p90
      %p93 = scmp.ne.s32.totalorder %s78, %s92
      %p94 = scmp.eq.s32.totalorder %s26, 0
      %p95 = por %p93, %p94
      %s97 = sadd.s32 %s96, 1
      %p100 = scmp.eq.s32.totalorder %s20, 1
      %p101 = scmp.ne.s32.totalorder %s96, %s98
      %p102 = scmp.eq.s32.totalorder %s20, 0
      %p103 = por %p101, %p102
      %p104 = scmp.ne.s32.totalorder %s96, %s98
      %p105 = scmp.eq.s32.totalorder %s25, 1
      %p106 = por %p104, %p105
      %p107 = scmp.ne.s32.totalorder %s98, %s99
      %p108 = scmp.eq.s32.totalorder %s25, 0
      %p109 = por %p107, %p108
      %p110 = scmp.ne.s32.totalorder %s98, %s99
      %p111 = scmp.eq.s32.totalorder %s26, 1
      %p112 = por %p110, %p111
      %p114 = scmp.ne.s32.totalorder %s99, %s113
      %p115 = scmp.eq.s32.totalorder %s26, 0
      %p116 = por %p114, %p115
      %s118 = sadd.s32 %s117, 1
      %p121 = scmp.eq.s32.totalorder %s20, 1
      %p122 = scmp.ne.s32.totalorder %s117, %s119
      %p123 = scmp.eq.s32.totalorder %s20, 0
      %p124 = por %p122, %p123
      %p125 = scmp.ne.s32.totalorder %s117, %s119
      %p126 = scmp.eq.s32.totalorder %s25, 1
      %p127 = por %p125, %p126
      %p128 = scmp.ne.s32.totalorder %s119, %s120
      %p129 = scmp.eq.s32.totalorder %s25, 0
      %p130 = por %p128, %p129
      %p131 = scmp.ne.s32.totalorder %s119, %s120
      %p132 = scmp.eq.s32.totalorder %s26, 1
      %p133 = por %p131, %p132
      %p135 = scmp.ne.s32.totalorder %s120, %s134
      %p136 = scmp.eq.s32.totalorder %s26, 0
      %p137 = por %p135, %p136
      %s139 = sadd.s32 %s138, 1
      %p142 = scmp.eq.s32.totalorder %s20, 1
      %p143 = scmp.ne.s32.totalorder %s138, %s140
      %p144 = scmp.eq.s32.totalorder %s20, 0
      %p145 = por %p143, %p144
      %p146 = scmp.ne.s32.totalorder %s138, %s140
      %p147 = scmp.eq.s32.totalorder %s25, 1
      %p148 = por %p146, %p147
      %p149 = scmp.ne.s32.totalorder %s140, %s141
      %p150 = scmp.eq.s32.totalorder %s25, 0
      %p151 = por %p149, %p150
      %p152 = scmp.ne.s32.totalorder %s140, %s141
      %p153 = scmp.eq.s32.totalorder %s26, 1
      %p154 = por %p152, %p153
      %p156 = scmp.ne.s32.totalorder %s141, %s155
      %p157 = scmp.eq.s32.totalorder %s26, 0
      %p158 = por %p156, %p157
      %s160 = sadd.s32 %s159, 1
      %p163 = scmp.eq.s32.totalorder %s20, 1
      %p164 = scmp.ne.s32.totalorder %s159, %s161
      %p165 = scmp.eq.s32.totalorder %s20, 0
      %p166 = por %p164, %p165
      %p167 = scmp.ne.s32.totalorder %s159, %s161
      %p168 = scmp.eq.s32.totalorder %s25, 1
      %p169 = por %p167, %p168
      %p170 = scmp.ne.s32.totalorder %s161, %s162
      %p171 = scmp.eq.s32.totalorder %s25, 0
      %p172 = por %p170, %p171
      %p173 = scmp.ne.s32.totalorder %s161, %s162
      %p174 = scmp.eq.s32.totalorder %s26, 1
      %p175 = por %p173, %p174
      %p177 = scmp.ne.s32.totalorder %s162, %s176
      %p178 = scmp.eq.s32.totalorder %s26, 0
      %p179 = por %p177, %p178
      %s180 = ssub.s32 %s20, %s27
      %p181 = scmp.eq.s32.totalorder %s180, 0
      %s183 = sadd.s32 %s182, 1
      %s184 = scalar_select %p181, %s182, %s183
      %p187 = pneg %p181
      %p188 = scmp.eq.s32.totalorder %s20, 1
      %p189 = por %p187, %p188
      %p190 = scmp.ne.s32.totalorder %s182, %s185
      %p191 = scmp.eq.s32.totalorder %s20, 0
      %p192 = por %p190, %p191
      %p193 = scmp.ne.s32.totalorder %s182, %s185
      %p194 = scmp.eq.s32.totalorder %s25, 1
      %p195 = por %p193, %p194
      %p196 = scmp.ne.s32.totalorder %s185, %s186
      %p197 = scmp.eq.s32.totalorder %s25, 0
      %p198 = por %p196, %p197
      %p199 = scmp.ne.s32.totalorder %s185, %s186
      %p200 = scmp.eq.s32.totalorder %s26, 1
      %p201 = por %p199, %p200
      %p203 = scmp.ne.s32.totalorder %s186, %s202
      %p204 = scmp.eq.s32.totalorder %s26, 0
      %p205 = por %p203, %p204
      %p206 = scmp.le.s32.totalorder 1, %s20
      %p207 = scmp.lt.s32.totalorder %s20, 3
      %p208 = pnand %p206, %p207
      %p209 = pneg %p208
      // Predicated region
      $region9: #{tpu_custom_call.1} parent=5 // pred_check
        _
      $region10: #{tpu_custom_call.1} parent=5 // pred_check_branch
        %211 = sbr.rel (%p208) target = $region12
      $region11: #{tpu_custom_call.1} parent=5 // pred_region
        %s212 = ssub.s32 %s20, 1
        // Predicated region
        $region13: #{tpu_custom_call.1} parent=11 // pred_check
          %p213 = pneg %p67
        $region14: #{tpu_custom_call.1} parent=11 // pred_check_branch
          %215 = sbr.rel (%p213) target = $region16
        $region15: #{tpu_custom_call.1} parent=11 // pred_region
          %s217 = ssub.s32 2048, 2048
          %218 = vsyncadd [#allocation6], %s217
          %s219 = sshll.u32 [#allocation5], 4
          %s220 = int_to_ptr.vmem [resolvable:$true] %s219
          %225 = dma.hbm_to_vmem [thread:$0]  %s1, 2048, %s220, [#allocation6], 128, 128, 8
        $region16: #{tpu_custom_call.1} parent=11 // pred_fallthru
          _
        // Predicated region
        $region17: #{tpu_custom_call.1} parent=11 // pred_check
          %p226 = pneg %p88
        $region18: #{tpu_custom_call.1} parent=11 // pred_check_branch
          %228 = sbr.rel (%p226) target = $region20
        $region19: #{tpu_custom_call.1} parent=11 // pred_region
          _
        $region20: #{tpu_custom_call.1} parent=11 // pred_fallthru
          _
        // Predicated region
        $region21: #{tpu_custom_call.1} parent=11 // pred_check
          %p229 = pneg %p109
        $region22: #{tpu_custom_call.1} parent=11 // pred_check_branch
          %231 = sbr.rel (%p229) target = $region24
        $region23: #{tpu_custom_call.1} parent=11 // pred_region
          %s233 = ssub.s32 2048, 2048
          %234 = vsyncadd [#allocation6], %s233
          %s235 = sshll.u32 [#allocation7], 4
          %s236 = int_to_ptr.vmem [resolvable:$true] %s235
          %241 = dma.hbm_to_vmem [thread:$0]  %s3, 2048, %s236, [#allocation6], 128, 128, 8
        $region24: #{tpu_custom_call.1} parent=11 // pred_fallthru
          _
        // Predicated region
        $region25: #{tpu_custom_call.1} parent=11 // pred_check
          %p242 = pneg %p130
        $region26: #{tpu_custom_call.1} parent=11 // pred_check_branch
          %244 = sbr.rel (%p242) target = $region28
        $region27: #{tpu_custom_call.1} parent=11 // pred_region
          _
        $region28: #{tpu_custom_call.1} parent=11 // pred_fallthru
          _
        // Predicated region
        $region29: #{tpu_custom_call.1} parent=11 // pred_check
          %p245 = pneg %p151
        $region30: #{tpu_custom_call.1} parent=11 // pred_check_branch
          %247 = sbr.rel (%p245) target = $region32
        $region31: #{tpu_custom_call.1} parent=11 // pred_region
          _
        $region32: #{tpu_custom_call.1} parent=11 // pred_fallthru
          _
        // Predicated region
        $region33: #{tpu_custom_call.1} parent=11 // pred_check
          %p248 = pneg %p172
        $region34: #{tpu_custom_call.1} parent=11 // pred_check_branch
          %250 = sbr.rel (%p248) target = $region36
        $region35: #{tpu_custom_call.1} parent=11 // pred_region
          _
        $region36: #{tpu_custom_call.1} parent=11 // pred_fallthru
          _
      $region12: #{tpu_custom_call.1} parent=5 // pred_fallthru
        _
      %p251 = scmp.lt.s32.totalorder %s20, 2
      // Predicated region
      $region37: #{tpu_custom_call.1} parent=5 // pred_check
        %p252 = pneg %p251
      $region38: #{tpu_custom_call.1} parent=5 // pred_check_branch
        %254 = sbr.rel (%p252) target = $region40
      $region39: #{tpu_custom_call.1} parent=5 // pred_region
        // Predicated region
        $region41: #{tpu_custom_call.1} parent=39 // pred_check
          %p255 = pneg %p40
        $region42: #{tpu_custom_call.1} parent=39 // pred_check_branch
          %257 = sbr.rel (%p255) target = $region44
        $region43: #{tpu_custom_call.1} parent=39 // pred_region
          %s258 = sand.u32 %s30, 1
          %s259 = scalar_lea.sflag [#allocation3], %s258
          %s260 = sand.u32 %s30, 1
          %s261 = smul.addr %s260, 8
          %s262 = scalar_lea.vmem [#allocation2], %s261
          %s264 = ssub.s32 128, 128
          %265 = vsyncadd %s259, %s264
          %s266 = smul.addr %s20, 128
          %s267 = scalar_lea.hbm %s0, %s266
          %s269 = sshll.u32 %s262, 4
          %s270 = int_to_ptr.vmem [resolvable:$true] %s269
          %272 = dma.hbm_to_vmem [thread:$0]  %s267, 128, %s270, %s259
        $region44: #{tpu_custom_call.1} parent=39 // pred_fallthru
          _
      $region40: #{tpu_custom_call.1} parent=5 // pred_fallthru
        _
      %p273 = scmp.le.s32.totalorder 1, %s20
      %p274 = scmp.lt.s32.totalorder %s20, 3
      %p275 = pnand %p273, %p274
      %p276 = pneg %p275
      // Predicated region
      $region45: #{tpu_custom_call.1} parent=5 // pred_check
        _
      $region46: #{tpu_custom_call.1} parent=5 // pred_check_branch
        %278 = sbr.rel (%p275) target = $region48
      $region47: #{tpu_custom_call.1} parent=5 // pred_region
        %s279 = ssub.s32 %s20, 1
        %s280 = sand.u32 %s33, 1
        %s281 = scalar_lea.sflag [#allocation3], %s280
        %s282 = sand.u32 %s33, 1
        %s283 = smul.addr %s282, 8
        %s284 = scalar_lea.vmem [#allocation2], %s283
        // Predicated region
        $region49: #{tpu_custom_call.1} parent=47 // pred_check
          %p285 = pneg %p46
        $region50: #{tpu_custom_call.1} parent=47 // pred_check_branch
          %287 = sbr.rel (%p285) target = $region52
        $region51: #{tpu_custom_call.1} parent=47 // pred_region
          %288 = dma.done %s281, 128
        $region52: #{tpu_custom_call.1} parent=47 // pred_fallthru
          _
        // Predicated region
        $region53: #{tpu_custom_call.1} parent=47 // pred_check
          %p289 = pneg %p67
        $region54: #{tpu_custom_call.1} parent=47 // pred_check_branch
          %291 = sbr.rel (%p289) target = $region56
        $region55: #{tpu_custom_call.1} parent=47 // pred_region
          %292 = dma.done [#allocation6], 2048
        $region56: #{tpu_custom_call.1} parent=47 // pred_fallthru
          _
        // Predicated region
        $region57: #{tpu_custom_call.1} parent=47 // pred_check
          %p293 = pneg %p109
        $region58: #{tpu_custom_call.1} parent=47 // pred_check_branch
          %295 = sbr.rel (%p293) target = $region60
        $region59: #{tpu_custom_call.1} parent=47 // pred_region
          %296 = dma.done [#allocation6], 2048
        $region60: #{tpu_custom_call.1} parent=47 // pred_fallthru
          _
        %s297 = sand.u32 %s33, 1
        %s298 = scalar_lea.sflag [#allocation3], %s297
        %s299 = sand.u32 %s33, 1
        %s300 = smul.addr %s299, 8
        %s301 = scalar_lea.vmem [#allocation2], %s300
        %p302 = pneg %p46
        %p303 = pneg %p43
        %p304 = pneg %p67
        %p305 = pneg %p64
        %p306 = pneg %p88
        %p307 = pneg %p85
        %p308 = pneg %p109
        %p309 = pneg %p106
        %p310 = pneg %p130
        %p311 = pneg %p127
        %p312 = pneg %p151
        %p313 = pneg %p148
        %p314 = pneg %p172
        %p315 = pneg %p169
        %p316 = pneg %p198
        %p317 = pneg %p195
        %s318 = sand.u32 %s185, 1
        %s319 = scalar_lea.sflag [#allocation4], %s318
        %s320 = sand.u32 %s185, 1
        %s321 = smul.addr %s320, 8
        %s322 = scalar_lea.vmem [#allocation8], %s321
        %v323 = vld [vmem:[%s284] sm:$0xff]
        %v324 = vld [vmem:[#allocation5] sm:$0xff]
        %v325 = vld [vmem:[#allocation5 + $0x8] sm:$0xff]
        %v326 = vld [vmem:[#allocation5 + $0x10] sm:$0xff]
        %v327 = vld [vmem:[#allocation5 + $0x18] sm:$0xff]
        %v328 = vld [vmem:[#allocation5 + $0x20] sm:$0xff]
        %v329 = vld [vmem:[#allocation5 + $0x28] sm:$0xff]
        %v330 = vld [vmem:[#allocation5 + $0x30] sm:$0xff]
        %v331 = vld [vmem:[#allocation5 + $0x38] sm:$0xff]
        %v332 = vld [vmem:[#allocation5 + $0x40] sm:$0xff]
        %v333 = vld [vmem:[#allocation5 + $0x48] sm:$0xff]
        %v334 = vld [vmem:[#allocation5 + $0x50] sm:$0xff]
        %v335 = vld [vmem:[#allocation5 + $0x58] sm:$0xff]
        %v336 = vld [vmem:[#allocation5 + $0x60] sm:$0xff]
        %v337 = vld [vmem:[#allocation5 + $0x68] sm:$0xff]
        %v338 = vld [vmem:[#allocation5 + $0x70] sm:$0xff]
        %v339 = vld [vmem:[#allocation5 + $0x78] sm:$0xff]
        %v340 = vld [vmem:[%s2] sm:$0x1]
        %v342 = vlaneseq
        %v343 = vshrl.u32 %v342, 7
        %v344 = vsub.s32 0, %v343
        %v345 = vrot.slane %v340, %v344
        %347 = vmatprep.subr.mxu0 0.0
        %348 = vmatpush1.msra.mxu0 %v339
        %349 = vmatprep.subr.mxu0 0.0
        %350 = vmatpush1.msra.mxu0 %v338
        %351 = vmatprep.subr.mxu0 0.0
        %352 = vmatpush1.msra.mxu0 %v337
        %353 = vmatprep.subr.mxu0 0.0
        %354 = vmatpush1.msra.mxu0 %v336
        %355 = vmatprep.subr.mxu0 0.0
        %356 = vmatpush1.msra.mxu0 %v335
        %357 = vmatprep.subr.mxu0 0.0
        %358 = vmatpush1.msra.mxu0 %v334
        %359 = vmatprep.subr.mxu0 0.0
        %360 = vmatpush1.msra.mxu0 %v333
        %361 = vmatprep.subr.mxu0 0.0
        %362 = vmatpush1.msra.mxu0 %v332
        %363 = vmatprep.subr.mxu0 0.0
        %364 = vmatpush1.msra.mxu0 %v331
        %365 = vmatprep.subr.mxu0 0.0
        %366 = vmatpush1.msra.mxu0 %v330
        %367 = vmatprep.subr.mxu0 0.0
        %368 = vmatpush1.msra.mxu0 %v329
        %369 = vmatprep.subr.mxu0 0.0
        %370 = vmatpush1.msra.mxu0 %v328
        %371 = vmatprep.subr.mxu0 0.0
        %372 = vmatpush1.msra.mxu0 %v327
        %373 = vmatprep.subr.mxu0 0.0
        %374 = vmatpush1.msra.mxu0 %v326
        %375 = vmatprep.subr.mxu0 0.0
        %376 = vmatpush1.msra.mxu0 %v325
        %377 = vmatprep.subr.mxu0 0.0
        %378 = vmatpush1.msra.mxu0 %v324
        %379 = vmatprep.subr.mxu0 0.0
        %380 = vmatpush2.msra.mxu0 0.0
        %381 = vmatprep.subr.mxu0 0.0
        %382 = vmatpush2.msra.mxu0 0.0
        %383 = vmatprep.subr.mxu0 0.0
        %384 = vmatpush2.msra.mxu0 0.0
        %385 = vmatprep.subr.mxu0 0.0
        %386 = vmatpush2.msra.mxu0 0.0
        %387 = vmatprep.subr.mxu0 0.0
        %388 = vmatpush2.msra.mxu0 0.0
        %389 = vmatprep.subr.mxu0 0.0
        %390 = vmatpush2.msra.mxu0 0.0
        %391 = vmatprep.subr.mxu0 0.0
        %392 = vmatpush2.msra.mxu0 0.0
        %393 = vmatprep.subr.mxu0 0.0
        %394 = vmatpush2.msra.mxu0 0.0
        %395 = vmatprep.subr.mxu0 0.0
        %396 = vmatpush2.msra.mxu0 0.0
        %397 = vmatprep.subr.mxu0 0.0
        %398 = vmatpush2.msra.mxu0 0.0
        %399 = vmatprep.subr.mxu0 0.0
        %400 = vmatpush2.msra.mxu0 0.0
        %401 = vmatprep.subr.mxu0 0.0
        %402 = vmatpush2.msra.mxu0 0.0
        %403 = vmatprep.subr.mxu0 0.0
        %404 = vmatpush2.msra.mxu0 0.0
        %405 = vmatprep.subr.mxu0 0.0
        %406 = vmatpush2.msra.mxu0 0.0
        %407 = vmatprep.subr.mxu0 0.0
        %408 = vmatpush2.msra.mxu0 0.0
        %409 = vmatprep.subr.mxu0 0.0
        %410 = vmatpush2.msra.mxu0 0.0
        %411 = vmatprep.mubr.f32.mxu0 0.0
        %412 = vmatmul.mubr.f32.gmra.mxu0 %v323
        %v413 = vpop.f32.mrf.mxu0
        %v414 = vadd.f32 %v345, %v413
        %v415 = vpop.f32.mrf.mxu0
        %416 = vdwg.mxu0
        %v417 = vmax.f32 %v414, 0.0
        %v418 = vld [vmem:[#allocation7] sm:$0xff]
        %v419 = vld [vmem:[#allocation7 + $0x8] sm:$0xff]
        %v420 = vld [vmem:[#allocation7 + $0x10] sm:$0xff]
        %v421 = vld [vmem:[#allocation7 + $0x18] sm:$0xff]
        %v422 = vld [vmem:[#allocation7 + $0x20] sm:$0xff]
        %v423 = vld [vmem:[#allocation7 + $0x28] sm:$0xff]
        %v424 = vld [vmem:[#allocation7 + $0x30] sm:$0xff]
        %v425 = vld [vmem:[#allocation7 + $0x38] sm:$0xff]
        %v426 = vld [vmem:[#allocation7 + $0x40] sm:$0xff]
        %v427 = vld [vmem:[#allocation7 + $0x48] sm:$0xff]
        %v428 = vld [vmem:[#allocation7 + $0x50] sm:$0xff]
        %v429 = vld [vmem:[#allocation7 + $0x58] sm:$0xff]
        %v430 = vld [vmem:[#allocation7 + $0x60] sm:$0xff]
        %v431 = vld [vmem:[#allocation7 + $0x68] sm:$0xff]
        %v432 = vld [vmem:[#allocation7 + $0x70] sm:$0xff]
        %v433 = vld [vmem:[#allocation7 + $0x78] sm:$0xff]
        %v434 = vld [vmem:[%s4] sm:$0x1]
        %v436 = vlaneseq
        %v437 = vshrl.u32 %v436, 7
        %v438 = vsub.s32 0, %v437
        %v439 = vrot.slane %v434, %v438
        %441 = vmatprep.subr.mxu0 0.0
        %442 = vmatpush1.msra.mxu0 %v433
        %443 = vmatprep.subr.mxu0 0.0
        %444 = vmatpush1.msra.mxu0 %v432
        %445 = vmatprep.subr.mxu0 0.0
        %446 = vmatpush1.msra.mxu0 %v431
        %447 = vmatprep.subr.mxu0 0.0
        %448 = vmatpush1.msra.mxu0 %v430
        %449 = vmatprep.subr.mxu0 0.0
        %450 = vmatpush1.msra.mxu0 %v429
        %451 = vmatprep.subr.mxu0 0.0
        %452 = vmatpush1.msra.mxu0 %v428
        %453 = vmatprep.subr.mxu0 0.0
        %454 = vmatpush1.msra.mxu0 %v427
        %455 = vmatprep.subr.mxu0 0.0
        %456 = vmatpush1.msra.mxu0 %v426
        %457 = vmatprep.subr.mxu0 0.0
        %458 = vmatpush1.msra.mxu0 %v425
        %459 = vmatprep.subr.mxu0 0.0
        %460 = vmatpush1.msra.mxu0 %v424
        %461 = vmatprep.subr.mxu0 0.0
        %462 = vmatpush1.msra.mxu0 %v423
        %463 = vmatprep.subr.mxu0 0.0
        %464 = vmatpush1.msra.mxu0 %v422
        %465 = vmatprep.subr.mxu0 0.0
        %466 = vmatpush1.msra.mxu0 %v421
        %467 = vmatprep.subr.mxu0 0.0
        %468 = vmatpush1.msra.mxu0 %v420
        %469 = vmatprep.subr.mxu0 0.0
        %470 = vmatpush1.msra.mxu0 %v419
        %471 = vmatprep.subr.mxu0 0.0
        %472 = vmatpush1.msra.mxu0 %v418
        %473 = vmatprep.subr.mxu0 0.0
        %474 = vmatpush2.msra.mxu0 0.0
        %475 = vmatprep.subr.mxu0 0.0
        %476 = vmatpush2.msra.mxu0 0.0
        %477 = vmatprep.subr.mxu0 0.0
        %478 = vmatpush2.msra.mxu0 0.0
        %479 = vmatprep.subr.mxu0 0.0
        %480 = vmatpush2.msra.mxu0 0.0
        %481 = vmatprep.subr.mxu0 0.0
        %482 = vmatpush2.msra.mxu0 0.0
        %483 = vmatprep.subr.mxu0 0.0
        %484 = vmatpush2.msra.mxu0 0.0
        %485 = vmatprep.subr.mxu0 0.0
        %486 = vmatpush2.msra.mxu0 0.0
        %487 = vmatprep.subr.mxu0 0.0
        %488 = vmatpush2.msra.mxu0 0.0
        %489 = vmatprep.subr.mxu0 0.0
        %490 = vmatpush2.msra.mxu0 0.0
        %491 = vmatprep.subr.mxu0 0.0
        %492 = vmatpush2.msra.mxu0 0.0
        %493 = vmatprep.subr.mxu0 0.0
        %494 = vmatpush2.msra.mxu0 0.0
        %495 = vmatprep.subr.mxu0 0.0
        %496 = vmatpush2.msra.mxu0 0.0
        %497 = vmatprep.subr.mxu0 0.0
        %498 = vmatpush2.msra.mxu0 0.0
        %499 = vmatprep.subr.mxu0 0.0
        %500 = vmatpush2.msra.mxu0 0.0
        %501 = vmatprep.subr.mxu0 0.0
        %502 = vmatpush2.msra.mxu0 0.0
        %503 = vmatprep.subr.mxu0 0.0
        %504 = vmatpush2.msra.mxu0 0.0
        %505 = vmatprep.mubr.f32.mxu0 0.0
        %506 = vmatmul.mubr.f32.gmra.mxu0 %v417
        %v507 = vpop.f32.mrf.mxu0
        %v508 = vadd.f32 %v439, %v507
        %v509 = vpop.f32.mrf.mxu0
        %510 = vdwg.mxu0
        %v511 = vadd.f32 %v508, %v323
        %v512 = vld [vmem:[%s5] sm:$0x1]
        %v513 = vld [vmem:[%s6] sm:$0x1]
        %v514 = vlaneseq
        %v515 = vand.u32 %v514, 127
        %vm516 = vcmp.lt.s32.totalorder %v515, 32
        %v517 = vsel %vm516, %v511, 0.0
        %518 = vadd.xlane.f32.xlu0 %v517
        %v519 = vpop.xlane.xlu0 %518
        %v520 = vmul.f32 %v519, 0.03125
        %v521 = vsub.f32 %v511, %v520
        %v522 = vsel %vm516, %v521, 0.0
        %v523 = vmul.f32 %v522, %v522
        %524 = vadd.xlane.f32.xlu0 %v523
        %v525 = vpop.xlane.xlu0 %524
        %v526 = vmul.f32 %v525, 0.03125
        %v527 = vadd.f32 %v526, 1e-05
        %v528 = vrsqrt.pop %v527
        %v529 = vmul.f32 %v521, %v528
        %v531 = vlaneseq
        %v532 = vshrl.u32 %v531, 7
        %v533 = vsub.s32 0, %v532
        %v534 = vrot.slane %v512, %v533
        %v536 = vmul.f32 %v529, %v534
        %v538 = vlaneseq
        %v539 = vshrl.u32 %v538, 7
        %v540 = vsub.s32 0, %v539
        %v541 = vrot.slane %v513, %v540
        %v543 = vadd.f32 %v536, %v541
        %544 = vst [vmem:[%s322] sm:$0xff] %v543
        %s545 = sand.u32 %s185, 1
        %s546 = scalar_lea.sflag [#allocation4], %s545
        %s547 = sand.u32 %s185, 1
        %s548 = smul.addr %s547, 8
        %s549 = scalar_lea.vmem [#allocation8], %s548
        // Predicated region
        $region61: #{tpu_custom_call.1} parent=47 // pred_check
          %p550 = pneg %p195
        $region62: #{tpu_custom_call.1} parent=47 // pred_check_branch
          %552 = sbr.rel (%p550) target = $region64
        $region63: #{tpu_custom_call.1} parent=47 // pred_region
          %s554 = ssub.s32 128, 128
          %555 = vsyncadd %s546, %s554
          %s556 = smul.addr %s25, 128
          %s557 = scalar_lea.hbm %s7, %s556
          %s559 = sshll.u32 %s549, 4
          %s560 = int_to_ptr.vmem [resolvable:$true] %s559
          %562 = dma.vmem_to_hbm [thread:$0]  %s560, 128, %s557, %s546
        $region64: #{tpu_custom_call.1} parent=47 // pred_fallthru
          _
      $region48: #{tpu_custom_call.1} parent=5 // pred_fallthru
        _
      %p563 = scmp.le.s32.totalorder 2, %s20
      // Predicated region
      $region65: #{tpu_custom_call.1} parent=5 // pred_check
        %p564 = pneg %p563
      $region66: #{tpu_custom_call.1} parent=5 // pred_check_branch
        %566 = sbr.rel (%p564) target = $region68
      $region67: #{tpu_custom_call.1} parent=5 // pred_region
        %s567 = ssub.s32 %s20, 2
        // Predicated region
        $region69: #{tpu_custom_call.1} parent=67 // pred_check
          %p568 = pneg %p201
        $region70: #{tpu_custom_call.1} parent=67 // pred_check_branch
          %570 = sbr.rel (%p568) target = $region72
        $region71: #{tpu_custom_call.1} parent=67 // pred_region
          %s571 = sand.u32 %s186, 1
          %s572 = scalar_lea.sflag [#allocation4], %s571
          %s573 = sand.u32 %s186, 1
          %s574 = smul.addr %s573, 8
          %s575 = scalar_lea.vmem [#allocation8], %s574
          %576 = dma.done %s572, 128
        $region72: #{tpu_custom_call.1} parent=67 // pred_fallthru
          _
      $region68: #{tpu_custom_call.1} parent=5 // pred_fallthru
        _
    $region6: #{tpu_custom_call.1} parent=1 // loop_footer
      %s24 = sadd.s32 1, %s20
    $region7: #{tpu_custom_call.1} parent=1 // loop_footer_branch
      %19 = sbr.rel target = $region3
    $region8: #{tpu_custom_call.1} parent=1 // loop_exit
      _
    %577 = vsyncpa [#allocation3], 1
    %s578 = scalar_lea.sflag [#allocation3], 1
    %579 = vsyncpa %s578, 1
    %580 = vsyncpa [#allocation6], 1
    %581 = vsyncpa [#allocation4], 1
    %s582 = scalar_lea.sflag [#allocation4], 1
    %583 = vsyncpa %s582, 1

</llo_original>
